<compile_context>
chip_gen: v6e
topology: v6e:2x2x1
jax: 0.10.0
libtpu: 0.0.40
codegen_flags: <defaults>
</compile_context>

<pallas_src>
import functools
import math

import jax
import jax.numpy as jnp
from jax import lax
from jax.experimental import pallas as pl
from jax.experimental.pallas import tpu as pltpu


def _round_up(x, m):
    return ((x + m - 1) // m) * m


# ---------------------------------------------------------------------------
# Row-tiled linear kernel:  out = x @ w + b
# ---------------------------------------------------------------------------

def _linear_kernel(x_ref, w_ref, b_ref, o_ref):
    # x: [tile, Fin], w: [Fin, Fp], b: [1, Fp] -> o: [tile, Fp]
    o_ref[...] = (
        jnp.dot(x_ref[...], w_ref[...], preferred_element_type=jnp.float32)
        + b_ref[...]
    )


def linear(x, w, b, *, tile_r=512):
    """x: [R, Fin] f32, w: [Fin, Fout], b: [1, Fout] -> [R, Fout] f32."""
    R, Fin = x.shape
    Fout = w.shape[1]

    # Lane-dense output: pad Fout up to a multiple of 128 (unmasked stores, full
    # MXU column use); slice back afterwards.
    Fp = _round_up(Fout, 128)
    if Fp != Fout:
        w = jnp.pad(w, ((0, 0), (0, Fp - Fout)))
        b = jnp.pad(b, ((0, 0), (0, Fp - Fout)))

    # Row grid: tile is a multiple of 8 (f32 sublane), capped for VMEM; pad rows so
    # the grid divides evenly (padding sliced off below).
    tile = min(tile_r, _round_up(R, 8))
    Rp = _round_up(R, tile)
    if Rp != R:
        x = jnp.pad(x, ((0, Rp - R), (0, 0)))

    out = pl.pallas_call(
        _linear_kernel,
        out_shape=jax.ShapeDtypeStruct((Rp, Fp), jnp.float32),
        grid=(Rp // tile,),
        in_specs=[
            pl.BlockSpec((tile, Fin), lambda i: (i, 0)),
            pl.BlockSpec((Fin, Fp), lambda i: (0, 0)),   # weights resident
            pl.BlockSpec((1, Fp), lambda i: (0, 0)),
        ],
        out_specs=pl.BlockSpec((tile, Fp), lambda i: (i, 0)),
        compiler_params=pltpu.CompilerParams(
            dimension_semantics=("parallel",)),
    )(x, w, b)
    return out[:R, :Fout]


# ---------------------------------------------------------------------------
# Fused bidirectional LSTM layer kernel
# ---------------------------------------------------------------------------

def _bilstm_kernel(xg_ref, wrec_ref, hseq_ref, hlast_ref, clast_ref,
                   h_sc, c_sc, *, hid, unroll):
    # xg_ref:   [T, Bp, 8H]  precomputed x@W_ih + (b_ih+b_hh); cols [0:4H]=fwd gates
    #                        at time t, cols [4H:8H]=rev gates at time t.
    #                        Per-direction gate order: (i, f, o, g).
    # wrec_ref: [2H, 8H]     block-diagonal recurrent weights (fwd | rev).
    # hseq_ref: [T, Bp, 2H]  per-timestep hidden output (fwd | rev).
    # hlast_ref/clast_ref: [2, Bp, H] final states per direction.
    # h_sc/c_sc: [Bp, 2H]    running states, [h_fwd | h_rev].
    T = xg_ref.shape[0]
    H = hid
    G = 4 * H

    h_sc[...] = jnp.zeros_like(h_sc)
    c_sc[...] = jnp.zeros_like(c_sc)
    w_rec = wrec_ref[...]

    def cell(gates, c_prev):
        # gate columns: [i | f | o | g], each H wide
        sig = jax.nn.sigmoid(gates[:, : 3 * H])
        i_g = sig[:, :H]
        f_g = sig[:, H:2 * H]
        o_g = sig[:, 2 * H:]
        g_g = jnp.tanh(gates[:, 3 * H:])
        c_new = f_g * c_prev + i_g * g_g
        h_new = o_g * jnp.tanh(c_new)
        return h_new, c_new

    def step(t, carry):
        tr = T - 1 - t
        h_prev = h_sc[...]                                   # [Bp, 2H]
        c_prev = c_sc[...]                                   # [Bp, 2H]
        # Single fused recurrent matmul for both directions / all 4 gates.
        rec = jnp.dot(h_prev, w_rec, preferred_element_type=jnp.float32)  # [Bp, 8H]

        gates_f = xg_ref[t, :, :G] + rec[:, :G]              # fwd, time t
        gates_r = xg_ref[tr, :, G:] + rec[:, G:]             # rev, time T-1-t

        h_f, c_f = cell(gates_f, c_prev[:, :H])
        h_r, c_r = cell(gates_r, c_prev[:, H:])

        h_sc[:, :H] = h_f
        h_sc[:, H:] = h_r
        c_sc[:, :H] = c_f
        c_sc[:, H:] = c_r

        hseq_ref[t, :, :H] = h_f
        hseq_ref[tr, :, H:] = h_r
        return carry

    # Short fixed trip-counts: unrolled fori_loop gives the LLO scheduler visibility
    # across steps while keeping live ranges bounded (vs. a static Python loop).
    lax.fori_loop(0, T, step, 0, unroll=bool(unroll))

    hlast_ref[0] = h_sc[:, :H]
    hlast_ref[1] = h_sc[:, H:]
    clast_ref[0] = c_sc[:, :H]
    clast_ref[1] = c_sc[:, H:]


def bilstm_layer(xg, w_rec, hid):
    T, Bp, _ = xg.shape
    H = hid
    kernel = functools.partial(_bilstm_kernel, hid=H, unroll=(T <= 32))
    return pl.pallas_call(
        kernel,
        out_shape=(
            jax.ShapeDtypeStruct((T, Bp, 2 * H), jnp.float32),
            jax.ShapeDtypeStruct((2, Bp, H), jnp.float32),
            jax.ShapeDtypeStruct((2, Bp, H), jnp.float32),
        ),
        in_specs=[pl.BlockSpec(memory_space=pltpu.MemorySpace.VMEM)] * 2,
        out_specs=(pl.BlockSpec(memory_space=pltpu.MemorySpace.VMEM),) * 3,
        scratch_shapes=[
            pltpu.VMEM((Bp, 2 * H), jnp.float32),   # h state (fwd | rev)
            pltpu.VMEM((Bp, 2 * H), jnp.float32),   # c state (fwd | rev)
        ],
    )(xg, w_rec)


# ---------------------------------------------------------------------------
# Parameter init (deterministic, PyTorch-style uniform ranges, fused layouts)
# ---------------------------------------------------------------------------

def _uniform(key, shape, scale):
    return jax.random.uniform(key, shape, jnp.float32, -scale, scale)


def init_params(key, input_dim, hid_dim, n_layers, output_dim):
    H = hid_dim
    keys = iter(jax.random.split(key, 4 + 8 * n_layers))
    params = {"hid_dim": H, "n_layers": n_layers, "output_dim": output_dim}

    s_in = 1.0 / math.sqrt(input_dim)
    params["w_in"] = _uniform(next(keys), (input_dim, 256), s_in)
    params["b_in"] = _uniform(next(keys), (1, 256), s_in)

    s_h = 1.0 / math.sqrt(H)
    lstm = []
    for layer in range(n_layers):
        fin = 256 if layer == 0 else 2 * H
        w_x_dirs, b_dirs, w_hh_dirs = [], [], []
        for _d in range(2):  # 0 = forward, 1 = reverse
            # fused per-direction gate layout: columns (i | f | o | g), each H wide
            w_x_dirs.append(_uniform(next(keys), (fin, 4 * H), s_h))
            w_hh_dirs.append(_uniform(next(keys), (H, 4 * H), s_h))
            b_ih = _uniform(next(keys), (1, 4 * H), s_h)
            b_hh = _uniform(next(keys), (1, 4 * H), s_h)
            b_dirs.append(b_ih + b_hh)          # fold biases once (hoisted)
        w_x = jnp.concatenate(w_x_dirs, axis=1)                 # [fin, 8H]
        b_x = jnp.concatenate(b_dirs, axis=1)                   # [1, 8H]
        z = jnp.zeros((H, 4 * H), jnp.float32)
        w_rec = jnp.concatenate(                                # block-diag [2H, 8H]
            [jnp.concatenate([w_hh_dirs[0], z], axis=1),
             jnp.concatenate([z, w_hh_dirs[1]], axis=1)], axis=0)
        lstm.append((w_x, b_x, w_rec))
    params["lstm"] = lstm

    s_out = 1.0 / math.sqrt(2 * H)
    params["w_out"] = _uniform(next(keys), (2 * H, output_dim), s_out)
    params["b_out"] = _uniform(next(keys), (1, output_dim), s_out)
    return params


# ---------------------------------------------------------------------------
# Forward pass (glue in plain JAX, hot paths in Pallas kernels)
# ---------------------------------------------------------------------------

def only_decoder_linear_emb_forward(params, inp, len_=None):
    # inp: [B, T, input_dim]  (len_ is accepted but unused, as in the PyTorch module)
    H = params["hid_dim"]
    out_dim = params["output_dim"]
    B, T, Din = inp.shape
    Bp = _round_up(B, 8)                      # sublane-aligned batch

    # Time-major + batch padding done on the narrow raw input (cheap transpose).
    x_tm = jnp.transpose(inp.astype(jnp.float32), (1, 0, 2))      # [T, B, Din]
    if Bp != B:
        x_tm = jnp.pad(x_tm, ((0, 0), (0, Bp - B), (0, 0)))
    x_rows = x_tm.reshape(T * Bp, Din)

    # fc_in  (row-tiled linear) -> time-major [T*Bp, 256]
    seq = linear(x_rows, params["w_in"], params["b_in"])

    hiddens, cells = [], []
    for w_x, b_x, w_rec in params["lstm"]:
        # Hoisted input projection: all timesteps, all 4 gates, both directions.
        xg = linear(seq, w_x, b_x).reshape(T, Bp, 8 * H)          # [T, Bp, 8H]
        hseq, hlast, clast = bilstm_layer(xg, w_rec, H)           # fused bi-LSTM
        seq = hseq.reshape(T * Bp, 2 * H)
        hiddens.append(hlast)                                      # [2, Bp, H]
        cells.append(clast)

    # fc_out (output features padded to 128 lanes inside linear, sliced back)
    pred = linear(seq, params["w_out"], params["b_out"])          # [T*Bp, out_dim]
    prediction = pred.reshape(T, Bp, out_dim)[:, :B].transpose(1, 0, 2)  # [B, T, out]

    hidden = jnp.concatenate(hiddens, axis=0)[:, :B, :]           # [2*n_layers, B, H]
    cell = jnp.concatenate(cells, axis=0)[:, :B, :]               # [2*n_layers, B, H]
    return prediction, hidden, cell


# ---------------------------------------------------------------------------

if __name__ == "__main__":
    B, T = 2, 8
    input_dim, hid_dim, n_layers, output_dim = 16, 32, 2, 16

    key = jax.random.PRNGKey(0)
    k_params, k_x = jax.random.split(key)
    params = init_params(k_params, input_dim, hid_dim, n_layers, output_dim)

    x = jax.random.normal(k_x, (B, T, input_dim), jnp.float32)
    len_ = jnp.full((B,), T, dtype=jnp.int32)

    prediction, hidden, cell = only_decoder_linear_emb_forward(params, x, len_)
    jax.block_until_ready((prediction, hidden, cell))

    assert prediction.shape == (B, T, output_dim)
    assert hidden.shape == (2 * n_layers, B, hid_dim)
    assert cell.shape == (2 * n_layers, B, hid_dim)
    assert jnp.all(jnp.isfinite(prediction))
    assert jnp.all(jnp.isfinite(hidden))
    assert jnp.all(jnp.isfinite(cell))
    print("KERNEL_OK")
</pallas_src>

<mosaic_0001>
module attributes {stable_mosaic.version = 11 : i64} {
  func.func @_linear_kernel(%arg0: i32, %arg1: memref<64x16xf32, #tpu.memory_space<vmem>>, %arg2: memref<16x256xf32, #tpu.memory_space<vmem>>, %arg3: memref<1x256xf32, #tpu.memory_space<vmem>>, %arg4: memref<64x256xf32, #tpu.memory_space<vmem>>) attributes {dimension_semantics = [#tpu.dimension_semantics<parallel>], iteration_bounds = array<i64: 1>, scalar_prefetch = 0 : i64, scratch_operands = 0 : i64, tpu.core_type = #tpu.core_type<tc>, window_params = [{transform_indices = @transform_0, window_bounds = array<i64: 64, 16>}, {pipeline_mode = #tpu.pipeline_mode<synchronous>, transform_indices = @transform_1, window_bounds = array<i64: 16, 256>}, {pipeline_mode = #tpu.pipeline_mode<synchronous>, transform_indices = @transform_2, window_bounds = array<i64: 1, 256>}, {transform_indices = @transform_3, window_bounds = array<i64: 64, 256>}]} {
    %c0 = arith.constant 0 : index
    %c0_0 = arith.constant 0 : index
    %0 = vector.load %arg1[%c0, %c0_0] : memref<64x16xf32, #tpu.memory_space<vmem>>, vector<64x16xf32>
    %c0_1 = arith.constant 0 : index
    %c0_2 = arith.constant 0 : index
    %1 = vector.load %arg2[%c0_1, %c0_2] : memref<16x256xf32, #tpu.memory_space<vmem>>, vector<16x256xf32>
    %cst = arith.constant dense<0.000000e+00> : vector<64x256xf32>
    %2 = tpu.matmul %0, %1, %cst {dimension_numbers = #tpu.dot_dimension_numbers<[1], [0], [0], [1], [0, 0, 1, 1], [], []>} : vector<64x16xf32>, vector<16x256xf32>, vector<64x256xf32> -> vector<64x256xf32>
    %c0_3 = arith.constant 0 : index
    %c0_4 = arith.constant 0 : index
    %3 = vector.load %arg3[%c0_3, %c0_4] : memref<1x256xf32, #tpu.memory_space<vmem>>, vector<1x256xf32>
    %4 = vector.broadcast %3 : vector<1x256xf32> to vector<64x256xf32>
    %5 = arith.addf %2, %4 : vector<64x256xf32>
    %c0_5 = arith.constant 0 : index
    %c0_6 = arith.constant 0 : index
    %6 = vector.load %arg4[%c0_5, %c0_6] : memref<64x256xf32, #tpu.memory_space<vmem>>, vector<64x256xf32>
    tpu.vector_store %arg4[%c0_5, %c0_6], %5 {strides = array<i32>} : memref<64x256xf32, #tpu.memory_space<vmem>>, vector<64x256xf32>,
    return
  }
  func.func @transform_0(%arg0: i32) -> (i32, i32) {
    %c0_i32 = arith.constant 0 : i32
    %c0_i32_0 = arith.constant 0 : i32
    return %arg0, %c0_i32 : i32, i32
  }
  func.func @transform_1(%arg0: i32) -> (i32, i32) {
    %c0_i32 = arith.constant 0 : i32
    %c0_i32_0 = arith.constant 0 : i32
    %c0_i32_1 = arith.constant 0 : i32
    return %c0_i32, %c0_i32_0 : i32, i32
  }
  func.func @transform_2(%arg0: i32) -> (i32, i32) {
    %c0_i32 = arith.constant 0 : i32
    %c0_i32_0 = arith.constant 0 : i32
    %c0_i32_1 = arith.constant 0 : i32
    return %c0_i32, %c0_i32_0 : i32, i32
  }
  func.func @transform_3(%arg0: i32) -> (i32, i32) {
    %c0_i32 = arith.constant 0 : i32
    %c0_i32_0 = arith.constant 0 : i32
    return %arg0, %c0_i32 : i32, i32
  }
}

</mosaic_0001>

<llo_original>
// kernel: tpu_custom_call.1
$region0: #{tpu_custom_call.1}
  #allocation0 [shape = 'u32[]', space=smem, size = 0x4, offset = 0x4, fixed_abs, tag = 'smem constant byte address 0x4 - core index']
  #allocation1 [shape = 'u32[144,128]{1,0:T(1,128)}', space=vmem, size = 0x12000, scoped, tag = 'internal scratch']
  %s0 = inlined_call_operand.vmem [shape: f32[64,16], index: 0, kind: input, shape index: {}]
  %s1 = inlined_call_operand.vmem [shape: f32[16,256], index: 1, kind: input, shape index: {}]
  %s2 = inlined_call_operand.vmem [shape: f32[1,256], index: 2, kind: input, shape index: {}]
  %s3 = inlined_call_operand.hbm [shape: f32[64,256], index: 3, kind: output, shape index: {}]
  %s4 = sld [smem:[#allocation0]]
  $region22: #{tpu_custom_call.1} parent=0
    _
  %s6 = ssub.s32 1, %s4
  %s7 = scalar_select 0, %s6, %s4
  $region1: #{tpu_custom_call.1} parent=0
    #allocation2 [shape = 'u8[65536]{0}', space=vmem, size = 0x10000, scoped, tag = 'output window, operand 0, single buffered']
    #allocation3 [shape = 's32[1]{0}', space=sflag, size = 0x4, scoped, tag = 'scoped memory for tpu_custom_call.1']
    %8 = vsyncpa [#allocation3], 0
    // Predicated region
    $region2: #{tpu_custom_call.1} parent=1 // pred_check
      _
    $region3: #{tpu_custom_call.1} parent=1 // pred_check_branch
      %10 = sbr.rel (0) target = $region5
    $region4: #{tpu_custom_call.1} parent=1 // pred_region
      _
    $region5: #{tpu_custom_call.1} parent=1 // pred_fallthru
      _
    // Predicated region
    $region6: #{tpu_custom_call.1} parent=1 // pred_check
      _
    $region7: #{tpu_custom_call.1} parent=1 // pred_check_branch
      %12 = sbr.rel (0) target = $region9
    $region8: #{tpu_custom_call.1} parent=1 // pred_region
      _
    $region9: #{tpu_custom_call.1} parent=1 // pred_fallthru
      _
    // Predicated region
    $region10: #{tpu_custom_call.1} parent=1 // pred_check
      _
    $region11: #{tpu_custom_call.1} parent=1 // pred_check_branch
      %14 = sbr.rel (0) target = $region13
    $region12: #{tpu_custom_call.1} parent=1 // pred_region
      _
    $region13: #{tpu_custom_call.1} parent=1 // pred_fallthru
      _
    %v15 = vld [vmem:[%s0] sm:$0xff]
    %v16 = vld [vmem:[%s0 + $0x8] sm:$0xff]
    %v17 = vld [vmem:[%s0 + $0x10] sm:$0xff]
    %v18 = vld [vmem:[%s0 + $0x18] sm:$0xff]
    %v19 = vld [vmem:[%s0 + $0x20] sm:$0xff]
    %v20 = vld [vmem:[%s0 + $0x28] sm:$0xff]
    %v21 = vld [vmem:[%s0 + $0x30] sm:$0xff]
    %v22 = vld [vmem:[%s0 + $0x38] sm:$0xff]
    %v23 = vld [vmem:[%s1] sm:$0xff]
    %v24 = vld [vmem:[%s1 + $0x8] sm:$0xff]
    %v25 = vld [vmem:[%s1 + $0x10] sm:$0xff]
    %v26 = vld [vmem:[%s1 + $0x18] sm:$0xff]
    %v27 = vld [vmem:[%s2] sm:$0x3]
    %v29 = vlaneseq
    %v30 = vshrl.u32 %v29, 7
    %v31 = vsub.s32 0, %v30
    %v32 = vrot.slane %v27, %v31
    %v33 = vlaneseq
    %v34 = vshrl.u32 %v33, 7
    %v35 = vsub.s32 1, %v34
    %v36 = vrot.slane %v27, %v35
    %vm39 = vcmask 130048
    %v41 = vsel %vm39, %v15, 0
    %v44 = vsel %vm39, %v16, 0
    %v47 = vsel %vm39, %v17, 0
    %v50 = vsel %vm39, %v18, 0
    %v53 = vsel %vm39, %v19, 0
    %v56 = vsel %vm39, %v20, 0
    %v59 = vsel %vm39, %v21, 0
    %v62 = vsel %vm39, %v22, 0
    %64 = vmatprep.subr.mxu0 0.0
    %65 = vmatpush1.msra.mxu0 0.0
    %66 = vmatprep.subr.mxu0 0.0
    %67 = vmatpush1.msra.mxu0 0.0
    %68 = vmatprep.subr.mxu0 0.0
    %69 = vmatpush1.msra.mxu0 0.0
    %70 = vmatprep.subr.mxu0 0.0
    %71 = vmatpush1.msra.mxu0 0.0
    %72 = vmatprep.subr.mxu0 0.0
    %73 = vmatpush1.msra.mxu0 0.0
    %74 = vmatprep.subr.mxu0 0.0
    %75 = vmatpush1.msra.mxu0 0.0
    %76 = vmatprep.subr.mxu0 0.0
    %77 = vmatpush1.msra.mxu0 0.0
    %78 = vmatprep.subr.mxu0 0.0
    %79 = vmatpush1.msra.mxu0 0.0
    %80 = vmatprep.subr.mxu0 0.0
    %81 = vmatpush1.msra.mxu0 0.0
    %82 = vmatprep.subr.mxu0 0.0
    %83 = vmatpush1.msra.mxu0 0.0
    %84 = vmatprep.subr.mxu0 0.0
    %85 = vmatpush1.msra.mxu0 0.0
    %86 = vmatprep.subr.mxu0 0.0
    %87 = vmatpush1.msra.mxu0 0.0
    %88 = vmatprep.subr.mxu0 0.0
    %89 = vmatpush1.msra.mxu0 0.0
    %90 = vmatprep.subr.mxu0 0.0
    %91 = vmatpush1.msra.mxu0 0.0
    %92 = vmatprep.subr.mxu0 %v26
    %93 = vmatpush1.msra.mxu0 %v25
    %94 = vmatprep.subr.mxu0 %v24
    %95 = vmatpush1.msra.mxu0 %v23
    %96 = vmatprep.subr.mxu0 0.0
    %97 = vmatpush2.msra.mxu0 0.0
    %98 = vmatprep.subr.mxu0 0.0
    %99 = vmatpush2.msra.mxu0 0.0
    %100 = vmatprep.subr.mxu0 0.0
    %101 = vmatpush2.msra.mxu0 0.0
    %102 = vmatprep.subr.mxu0 0.0
    %103 = vmatpush2.msra.mxu0 0.0
    %104 = vmatprep.subr.mxu0 0.0
    %105 = vmatpush2.msra.mxu0 0.0
    %106 = vmatprep.subr.mxu0 0.0
    %107 = vmatpush2.msra.mxu0 0.0
    %108 = vmatprep.subr.mxu0 0.0
    %109 = vmatpush2.msra.mxu0 0.0
    %110 = vmatprep.subr.mxu0 0.0
    %111 = vmatpush2.msra.mxu0 0.0
    %112 = vmatprep.subr.mxu0 0.0
    %113 = vmatpush2.msra.mxu0 0.0
    %114 = vmatprep.subr.mxu0 0.0
    %115 = vmatpush2.msra.mxu0 0.0
    %116 = vmatprep.subr.mxu0 0.0
    %117 = vmatpush2.msra.mxu0 0.0
    %118 = vmatprep.subr.mxu0 0.0
    %119 = vmatpush2.msra.mxu0 0.0
    %120 = vmatprep.subr.mxu0 0.0
    %121 = vmatpush2.msra.mxu0 0.0
    %122 = vmatprep.subr.mxu0 0.0
    %123 = vmatpush2.msra.mxu0 0.0
    %124 = vmatprep.subr.mxu0 0.0
    %125 = vmatpush2.msra.mxu0 0.0
    %126 = vmatprep.subr.mxu0 0.0
    %127 = vmatpush2.msra.mxu0 0.0
    %128 = vmatprep.mubr.f32.mxu0 0.0
    %129 = vmatmul.mubr.f32.gmra.mxu0 %v41
    %v130 = vpop.f32.mrf.mxu0
    %v131 = vadd.f32 %v32, %v130
    %v132 = vpop.f32.mrf.mxu0
    %v133 = vadd.f32 %v36, %v132
    %134 = vmatprep.mubr.f32.mxu0 0.0
    %135 = vmatmul.mubr.f32.gmra.mxu0 %v44
    %v136 = vpop.f32.mrf.mxu0
    %v137 = vadd.f32 %v32, %v136
    %v138 = vpop.f32.mrf.mxu0
    %v139 = vadd.f32 %v36, %v138
    %140 = vmatprep.mubr.f32.mxu0 0.0
    %141 = vmatmul.mubr.f32.gmra.mxu0 %v47
    %v142 = vpop.f32.mrf.mxu0
    %v143 = vadd.f32 %v32, %v142
    %v144 = vpop.f32.mrf.mxu0
    %v145 = vadd.f32 %v36, %v144
    %146 = vmatprep.mubr.f32.mxu0 0.0
    %147 = vmatmul.mubr.f32.gmra.mxu0 %v50
    %v148 = vpop.f32.mrf.mxu0
    %v149 = vadd.f32 %v32, %v148
    %v150 = vpop.f32.mrf.mxu0
    %v151 = vadd.f32 %v36, %v150
    %152 = vmatprep.mubr.f32.mxu0 0.0
    %153 = vmatmul.mubr.f32.gmra.mxu0 %v53
    %v154 = vpop.f32.mrf.mxu0
    %v155 = vadd.f32 %v32, %v154
    %v156 = vpop.f32.mrf.mxu0
    %v157 = vadd.f32 %v36, %v156
    %158 = vmatprep.mubr.f32.mxu0 0.0
    %159 = vmatmul.mubr.f32.gmra.mxu0 %v56
    %v160 = vpop.f32.mrf.mxu0
    %v161 = vadd.f32 %v32, %v160
    %v162 = vpop.f32.mrf.mxu0
    %v163 = vadd.f32 %v36, %v162
    %164 = vmatprep.mubr.f32.mxu0 0.0
    %165 = vmatmul.mubr.f32.gmra.mxu0 %v59
    %v166 = vpop.f32.mrf.mxu0
    %v167 = vadd.f32 %v32, %v166
    %v168 = vpop.f32.mrf.mxu0
    %v169 = vadd.f32 %v36, %v168
    %170 = vmatprep.mubr.f32.mxu0 0.0
    %171 = vmatmul.mubr.f32.gmra.mxu0 %v62
    %v172 = vpop.f32.mrf.mxu0
    %v173 = vadd.f32 %v32, %v172
    %v174 = vpop.f32.mrf.mxu0
    %v175 = vadd.f32 %v36, %v174
    %176 = vdwg.mxu0
    %177 = vst [vmem:[#allocation2] sm:$0xff] %v131
    %178 = vst [vmem:[#allocation2 + $0x8] sm:$0xff] %v133
    %179 = vst [vmem:[#allocation2 + $0x10] sm:$0xff] %v137
    %180 = vst [vmem:[#allocation2 + $0x18] sm:$0xff] %v139
    %181 = vst [vmem:[#allocation2 + $0x20] sm:$0xff] %v143
    %182 = vst [vmem:[#allocation2 + $0x28] sm:$0xff] %v145
    %183 = vst [vmem:[#allocation2 + $0x30] sm:$0xff] %v149
    %184 = vst [vmem:[#allocation2 + $0x38] sm:$0xff] %v151
    %185 = vst [vmem:[#allocation2 + $0x40] sm:$0xff] %v155
    %186 = vst [vmem:[#allocation2 + $0x48] sm:$0xff] %v157
    %187 = vst [vmem:[#allocation2 + $0x50] sm:$0xff] %v161
    %188 = vst [vmem:[#allocation2 + $0x58] sm:$0xff] %v163
    %189 = vst [vmem:[#allocation2 + $0x60] sm:$0xff] %v167
    %190 = vst [vmem:[#allocation2 + $0x68] sm:$0xff] %v169
    %191 = vst [vmem:[#allocation2 + $0x70] sm:$0xff] %v173
    %192 = vst [vmem:[#allocation2 + $0x78] sm:$0xff] %v175
    // Predicated region
    $region14: #{tpu_custom_call.1} parent=1 // pred_check
      _
    $region15: #{tpu_custom_call.1} parent=1 // pred_check_branch
      %194 = sbr.rel (0) target = $region17
    $region16: #{tpu_custom_call.1} parent=1 // pred_region
      %s196 = ssub.s32 2048, 2048
      %197 = vsyncadd [#allocation3], %s196
      %s198 = sshll.u32 [#allocation2], 4
      %s199 = int_to_ptr.vmem [resolvable:$true] %s198
      %204 = dma.vmem_to_hbm [thread:$0]  %s199, 2048, %s3, [#allocation3], 256, 256, 16
    $region17: #{tpu_custom_call.1} parent=1 // pred_fallthru
      _
    // Predicated region
    $region18: #{tpu_custom_call.1} parent=1 // pred_check
      _
    $region19: #{tpu_custom_call.1} parent=1 // pred_check_branch
      %206 = sbr.rel (0) target = $region21
    $region20: #{tpu_custom_call.1} parent=1 // pred_region
      %207 = dma.done [#allocation3], 2048
    $region21: #{tpu_custom_call.1} parent=1 // pred_fallthru
      _
    %208 = vsyncpa [#allocation3], 1

</llo_original>
